<compile_context>
chip_gen: v5e
topology: v5e:2x2
jax: 0.10.0
libtpu: 0.0.40
codegen_flags: <defaults>
</compile_context>

<pallas_src>
import math

import jax
import jax.numpy as jnp
from jax.experimental import pallas as pl
from jax.experimental.pallas import tpu as pltpu


def make_mapping_kernel(num_layers, gains, matmul_dtype):
    """Fused kernel. gains[i] = lr_multiplier / sqrt(din_i) * sqrt(2), static floats."""

    def kernel(*refs):
        # refs: zT, L, (w_0, b_0), ..., (w_{n-1}, b_{n-1}), outT
        zt_ref, l_ref = refs[0], refs[1]
        out_ref = refs[-1]
        wb = refs[2:-1]

        # x^T = L @ z^T  ==  torch.bmm(L, z[:, :, None]).squeeze(), transposed.
        # Both operands feed the MXU directly: no in-kernel transpose anywhere.
        x = jnp.dot(l_ref[...], zt_ref[...],
                    preferred_element_type=jnp.float32)            # (M, TB) f32

        for i in range(num_layers):
            w = wb[2 * i][...]                                     # (dout, din) raw, resident
            b = wb[2 * i + 1][...]                                 # (dout, 1)  pre-scaled bias
            y = jnp.dot(w, x.astype(matmul_dtype),
                        preferred_element_type=jnp.float32)        # (dout, TB)
            # weight gain applied to the activation tile (not the resident weight);
            # relu def_gain sqrt(2) is folded into `gains` and the pre-scaled bias.
            x = jnp.maximum(y * gains[i] + b, 0.0)

        out_ref[...] = x.astype(out_ref.dtype)

    return kernel


def mapping_network_forward(z, diagonal_params, basis_params, weights, biases,
                            lr_multiplier=0.01, eps=1e-6,
                            matmul_dtype=jnp.float32, max_batch_tile=512):
    """JAX wrapper: builds L (QR glue), lays data out features-x-batch, calls the kernel.

    max_batch_tile must be a multiple of 128 (it tiles the lane/batch axis).
    """
    assert max_batch_tile % 128 == 0
    batch, M = z.shape
    num_layers = len(weights)
    out_dim = weights[-1].shape[0]
    act_gain = math.sqrt(2.0)   # bias_act default gain for 'relu'

    # --- glue: parameter construction (matches MappingNetwork.forward prologue) ---
    D_sqrt = jnp.diag(jnp.abs(diagonal_params) + eps)
    # TODO(synk): QR decomposition has no Pallas equivalent; done with jnp.linalg.qr here.
    Q, _ = jnp.linalg.qr(jnp.tanh(basis_params))
    L = (Q @ D_sqrt).astype(matmul_dtype)       # used as-is: x^T = L @ z^T (no transpose needed)

    # relu(a) * g == relu(a * g) for g > 0  ->  fold act_gain into gains and the bias.
    gains = tuple(float(lr_multiplier / math.sqrt(w.shape[1]) * act_gain) for w in weights)

    # Transposed (features x batch) layout: batch on lanes -> lane-dense stores.
    zT = z.T.astype(matmul_dtype)               # (M, batch)

    # Batch (lane) tiling: pad to a multiple of the tile when batch is large.
    if batch > max_batch_tile:
        tb = max_batch_tile                      # multiple of 128 -> lane-aligned blocks
        padded = ((batch + tb - 1) // tb) * tb
        if padded != batch:
            zT = jnp.pad(zT, ((0, 0), (0, padded - batch)))
    else:
        tb = batch                               # single tile == full extent (allowed)
        padded = batch
    grid = (padded // tb,)

    wb_args, wb_specs = [], []
    for w, b in zip(weights, biases):
        wb_args.append(w.astype(matmul_dtype))                                # raw weight, resident
        wb_args.append((b * (lr_multiplier * act_gain))
                       .reshape(-1, 1).astype(jnp.float32))                   # (dout, 1), pre-scaled
        wb_specs.append(pl.BlockSpec(w.shape, lambda i: (0, 0)))
        wb_specs.append(pl.BlockSpec((w.shape[0], 1), lambda i: (0, 0)))

    in_specs = (
        [pl.BlockSpec((M, tb), lambda i: (0, i)),      # zT: tiled over batch lanes
         pl.BlockSpec((M, M), lambda i: (0, 0))]       # L: resident across all tiles
        + wb_specs
    )
    out_specs = pl.BlockSpec((out_dim, tb), lambda i: (0, i))

    kernel = make_mapping_kernel(num_layers, gains, matmul_dtype)

    outT = pl.pallas_call(
        kernel,
        out_shape=jax.ShapeDtypeStruct((out_dim, padded), jnp.float32),
        grid=grid,
        in_specs=in_specs,
        out_specs=out_specs,
        compiler_params=pltpu.CompilerParams(
            dimension_semantics=("parallel",),          # independent batch tiles (megacore)
        ),
    )(zT, L, *wb_args)

    out = outT.T                                        # layout plumbing back to (batch, out_dim)
    if padded != batch:
        out = out[:batch]
    return out


def _reference_forward(z, diagonal_params, basis_params, weights, biases,
                       lr_multiplier=0.01, eps=1e-6, matmul_dtype=jnp.float32):
    """Pure-JAX reference matching the PyTorch module (optional bf16 matmul operands)."""
    D_sqrt = jnp.diag(jnp.abs(diagonal_params) + eps)
    Q, _ = jnp.linalg.qr(jnp.tanh(basis_params))
    L = Q @ D_sqrt
    x = jnp.dot(z.astype(matmul_dtype), L.astype(matmul_dtype).T,
                preferred_element_type=jnp.float32)
    for w, b in zip(weights, biases):
        wg = lr_multiplier / math.sqrt(w.shape[1])
        xw = jnp.dot(x.astype(matmul_dtype), (w * wg).astype(matmul_dtype).T,
                     preferred_element_type=jnp.float32)
        x = jnp.maximum(xw + b * lr_multiplier, 0.0) * math.sqrt(2.0)
    return x


if __name__ == "__main__":
    key = jax.random.PRNGKey(0)
    channels_list = [32, 32, 32]      # matrix_size = 32, two FC layers
    lr_multiplier = 0.01
    M = channels_list[0]
    num_layers = len(channels_list) - 1

    keys = jax.random.split(key, 2 * num_layers + 3)
    diagonal_params = jnp.ones((M,), jnp.float32)                            # torch.ones
    basis_params = jax.random.normal(keys[0], (M, M), dtype=jnp.float32)     # torch.randn
    weights, biases = [], []
    for i in range(num_layers):
        din, dout = channels_list[i], channels_list[i + 1]
        weights.append(jax.random.normal(keys[1 + i], (dout, din), jnp.float32) / lr_multiplier)
        biases.append(jax.random.normal(keys[1 + num_layers + i], (dout,), jnp.float32))

    # --- run 1: small batch, f32 MXU operands, single tile (tight numerical check) ---
    z1 = jax.random.normal(keys[-2], (8, M), dtype=jnp.float32)
    out1 = mapping_network_forward(z1, diagonal_params, basis_params, weights, biases,
                                   lr_multiplier, matmul_dtype=jnp.float32)
    jax.block_until_ready(out1)
    ref1 = _reference_forward(z1, diagonal_params, basis_params, weights, biases, lr_multiplier)
    assert out1.shape == (8, channels_list[-1])
    assert jnp.allclose(out1, ref1, atol=1e-4, rtol=1e-4), "f32 mismatch vs JAX reference"

    # --- run 2: ragged batch, bf16 MXU operands, batch-tiled parallel grid (pad + 2 tiles) ---
    z2 = jax.random.normal(keys[-1], (200, M), dtype=jnp.float32)
    out2 = mapping_network_forward(z2, diagonal_params, basis_params, weights, biases,
                                   lr_multiplier, matmul_dtype=jnp.bfloat16,
                                   max_batch_tile=128)
    jax.block_until_ready(out2)
    ref2 = _reference_forward(z2, diagonal_params, basis_params, weights, biases,
                              lr_multiplier, matmul_dtype=jnp.bfloat16)
    assert out2.shape == (200, channels_list[-1])
    assert jnp.allclose(out2, ref2, atol=5e-2, rtol=5e-2), "bf16 mismatch vs JAX reference"

    print("KERNEL_OK")
</pallas_src>

<mosaic_0001>
module attributes {stable_mosaic.version = 11 : i64} {
  func.func @kernel(%arg0: i32, %arg1: memref<32x8xf32, #tpu.memory_space<vmem>>, %arg2: memref<32x32xf32, #tpu.memory_space<vmem>>, %arg3: memref<32x32xf32, #tpu.memory_space<vmem>>, %arg4: memref<32x1xf32, #tpu.memory_space<vmem>>, %arg5: memref<32x32xf32, #tpu.memory_space<vmem>>, %arg6: memref<32x1xf32, #tpu.memory_space<vmem>>, %arg7: memref<32x8xf32, #tpu.memory_space<vmem>>) attributes {dimension_semantics = [#tpu.dimension_semantics<parallel>], iteration_bounds = array<i64: 1>, scalar_prefetch = 0 : i64, scratch_operands = 0 : i64, tpu.core_type = #tpu.core_type<tc>, window_params = [{transform_indices = @transform_0, window_bounds = array<i64: 32, 8>}, {pipeline_mode = #tpu.pipeline_mode<synchronous>, transform_indices = @transform_1, window_bounds = array<i64: 32, 32>}, {pipeline_mode = #tpu.pipeline_mode<synchronous>, transform_indices = @transform_2, window_bounds = array<i64: 32, 32>}, {pipeline_mode = #tpu.pipeline_mode<synchronous>, transform_indices = @transform_3, window_bounds = array<i64: 32, 1>}, {pipeline_mode = #tpu.pipeline_mode<synchronous>, transform_indices = @transform_4, window_bounds = array<i64: 32, 32>}, {pipeline_mode = #tpu.pipeline_mode<synchronous>, transform_indices = @transform_5, window_bounds = array<i64: 32, 1>}, {transform_indices = @transform_6, window_bounds = array<i64: 32, 8>}]} {
    %c0 = arith.constant 0 : index
    %c0_0 = arith.constant 0 : index
    %0 = vector.load %arg2[%c0, %c0_0] : memref<32x32xf32, #tpu.memory_space<vmem>>, vector<32x32xf32>
    %c0_1 = arith.constant 0 : index
    %c0_2 = arith.constant 0 : index
    %1 = vector.load %arg1[%c0_1, %c0_2] : memref<32x8xf32, #tpu.memory_space<vmem>>, vector<32x8xf32>
    %cst = arith.constant dense<0.000000e+00> : vector<32x8xf32>
    %2 = tpu.matmul %0, %1, %cst {dimension_numbers = #tpu.dot_dimension_numbers<[1], [0], [0], [1], [0, 0, 1, 1], [], []>} : vector<32x32xf32>, vector<32x8xf32>, vector<32x8xf32> -> vector<32x8xf32>
    %c0_3 = arith.constant 0 : index
    %c0_4 = arith.constant 0 : index
    %3 = vector.load %arg3[%c0_3, %c0_4] : memref<32x32xf32, #tpu.memory_space<vmem>>, vector<32x32xf32>
    %c0_5 = arith.constant 0 : index
    %c0_6 = arith.constant 0 : index
    %4 = vector.load %arg4[%c0_5, %c0_6] : memref<32x1xf32, #tpu.memory_space<vmem>>, vector<32x1xf32>
    %cst_7 = arith.constant dense<0.000000e+00> : vector<32x8xf32>
    %5 = tpu.matmul %3, %2, %cst_7 {dimension_numbers = #tpu.dot_dimension_numbers<[1], [0], [0], [1], [0, 0, 1, 1], [], []>} : vector<32x32xf32>, vector<32x8xf32>, vector<32x8xf32> -> vector<32x8xf32>
    %cst_8 = arith.constant 2.500000e-03 : f32
    %6 = vector.broadcast %cst_8 : f32 to vector<32x8xf32>
    %7 = arith.mulf %5, %6 : vector<32x8xf32>
    %8 = vector.broadcast %4 : vector<32x1xf32> to vector<32x8xf32>
    %9 = arith.addf %7, %8 : vector<32x8xf32>
    %cst_9 = arith.constant 0.000000e+00 : f32
    %10 = vector.broadcast %cst_9 : f32 to vector<32x8xf32>
    %11 = arith.maximumf %9, %10 : vector<32x8xf32>
    %c0_10 = arith.constant 0 : index
    %c0_11 = arith.constant 0 : index
    %12 = vector.load %arg5[%c0_10, %c0_11] : memref<32x32xf32, #tpu.memory_space<vmem>>, vector<32x32xf32>
    %c0_12 = arith.constant 0 : index
    %c0_13 = arith.constant 0 : index
    %13 = vector.load %arg6[%c0_12, %c0_13] : memref<32x1xf32, #tpu.memory_space<vmem>>, vector<32x1xf32>
    %cst_14 = arith.constant dense<0.000000e+00> : vector<32x8xf32>
    %14 = tpu.matmul %12, %11, %cst_14 {dimension_numbers = #tpu.dot_dimension_numbers<[1], [0], [0], [1], [0, 0, 1, 1], [], []>} : vector<32x32xf32>, vector<32x8xf32>, vector<32x8xf32> -> vector<32x8xf32>
    %cst_15 = arith.constant 2.500000e-03 : f32
    %15 = vector.broadcast %cst_15 : f32 to vector<32x8xf32>
    %16 = arith.mulf %14, %15 : vector<32x8xf32>
    %17 = vector.broadcast %13 : vector<32x1xf32> to vector<32x8xf32>
    %18 = arith.addf %16, %17 : vector<32x8xf32>
    %cst_16 = arith.constant 0.000000e+00 : f32
    %19 = vector.broadcast %cst_16 : f32 to vector<32x8xf32>
    %20 = arith.maximumf %18, %19 : vector<32x8xf32>
    %c0_17 = arith.constant 0 : index
    %c0_18 = arith.constant 0 : index
    %21 = vector.load %arg7[%c0_17, %c0_18] : memref<32x8xf32, #tpu.memory_space<vmem>>, vector<32x8xf32>
    tpu.vector_store %arg7[%c0_17, %c0_18], %20 {strides = array<i32>} : memref<32x8xf32, #tpu.memory_space<vmem>>, vector<32x8xf32>,
    return
  }
  func.func @transform_0(%arg0: i32) -> (i32, i32) {
    %c0_i32 = arith.constant 0 : i32
    %c0_i32_0 = arith.constant 0 : i32
    return %c0_i32, %arg0 : i32, i32
  }
  func.func @transform_1(%arg0: i32) -> (i32, i32) {
    %c0_i32 = arith.constant 0 : i32
    %c0_i32_0 = arith.constant 0 : i32
    %c0_i32_1 = arith.constant 0 : i32
    return %c0_i32, %c0_i32_0 : i32, i32
  }
  func.func @transform_2(%arg0: i32) -> (i32, i32) {
    %c0_i32 = arith.constant 0 : i32
    %c0_i32_0 = arith.constant 0 : i32
    %c0_i32_1 = arith.constant 0 : i32
    return %c0_i32, %c0_i32_0 : i32, i32
  }
  func.func @transform_3(%arg0: i32) -> (i32, i32) {
    %c0_i32 = arith.constant 0 : i32
    %c0_i32_0 = arith.constant 0 : i32
    %c0_i32_1 = arith.constant 0 : i32
    return %c0_i32, %c0_i32_0 : i32, i32
  }
  func.func @transform_4(%arg0: i32) -> (i32, i32) {
    %c0_i32 = arith.constant 0 : i32
    %c0_i32_0 = arith.constant 0 : i32
    %c0_i32_1 = arith.constant 0 : i32
    return %c0_i32, %c0_i32_0 : i32, i32
  }
  func.func @transform_5(%arg0: i32) -> (i32, i32) {
    %c0_i32 = arith.constant 0 : i32
    %c0_i32_0 = arith.constant 0 : i32
    %c0_i32_1 = arith.constant 0 : i32
    return %c0_i32, %c0_i32_0 : i32, i32
  }
  func.func @transform_6(%arg0: i32) -> (i32, i32) {
    %c0_i32 = arith.constant 0 : i32
    %c0_i32_0 = arith.constant 0 : i32
    return %c0_i32, %arg0 : i32, i32
  }
}

</mosaic_0001>

<llo_original>
// kernel: tpu_custom_call.1
$region0: #{tpu_custom_call.1}
  #allocation0 [shape = 'u32[]', space=smem, size = 0x4, offset = 0x4, fixed_abs, tag = 'smem constant byte address 0x4 - core index']
  #allocation1 [shape = 'u32[72,128]{1,0:T(1,128)}', space=vmem, size = 0x9000, scoped, tag = 'internal scratch']
  %s0 = inlined_call_operand.vmem [shape: f32[32,8], index: 0, kind: input, shape index: {}]
  %s1 = inlined_call_operand.vmem [shape: f32[32,32], index: 1, kind: input, shape index: {}]
  %s2 = inlined_call_operand.vmem [shape: f32[32,32], index: 2, kind: input, shape index: {}]
  %s3 = inlined_call_operand.vmem [shape: f32[32,1], index: 3, kind: input, shape index: {}]
  %s4 = inlined_call_operand.vmem [shape: f32[32,32], index: 4, kind: input, shape index: {}]
  %s5 = inlined_call_operand.vmem [shape: f32[32,1], index: 5, kind: input, shape index: {}]
  %s6 = inlined_call_operand.vmem [shape: f32[32,8], index: 6, kind: output, shape index: {}]
  %s7 = sld [smem:[#allocation0]]
  $region34: #{tpu_custom_call.1} parent=0
    _
  %s9 = ssub.s32 1, %s7
  %s10 = scalar_select 0, %s9, %s7
  // Predicated region
  $region2: #{tpu_custom_call.1} parent=0 // pred_check
    _
  $region3: #{tpu_custom_call.1} parent=0 // pred_check_branch
    %12 = sbr.rel (0) target = $region5
  $region4: #{tpu_custom_call.1} parent=0 // pred_region
    _
  $region5: #{tpu_custom_call.1} parent=0 // pred_fallthru
    _
  // Predicated region
  $region6: #{tpu_custom_call.1} parent=0 // pred_check
    _
  $region7: #{tpu_custom_call.1} parent=0 // pred_check_branch
    %14 = sbr.rel (0) target = $region9
  $region8: #{tpu_custom_call.1} parent=0 // pred_region
    _
  $region9: #{tpu_custom_call.1} parent=0 // pred_fallthru
    _
  // Predicated region
  $region10: #{tpu_custom_call.1} parent=0 // pred_check
    _
  $region11: #{tpu_custom_call.1} parent=0 // pred_check_branch
    %16 = sbr.rel (0) target = $region13
  $region12: #{tpu_custom_call.1} parent=0 // pred_region
    _
  $region13: #{tpu_custom_call.1} parent=0 // pred_fallthru
    _
  // Predicated region
  $region14: #{tpu_custom_call.1} parent=0 // pred_check
    _
  $region15: #{tpu_custom_call.1} parent=0 // pred_check_branch
    %18 = sbr.rel (0) target = $region17
  $region16: #{tpu_custom_call.1} parent=0 // pred_region
    _
  $region17: #{tpu_custom_call.1} parent=0 // pred_fallthru
    _
  // Predicated region
  $region18: #{tpu_custom_call.1} parent=0 // pred_check
    _
  $region19: #{tpu_custom_call.1} parent=0 // pred_check_branch
    %20 = sbr.rel (0) target = $region21
  $region20: #{tpu_custom_call.1} parent=0 // pred_region
    _
  $region21: #{tpu_custom_call.1} parent=0 // pred_fallthru
    _
  // Predicated region
  $region22: #{tpu_custom_call.1} parent=0 // pred_check
    _
  $region23: #{tpu_custom_call.1} parent=0 // pred_check_branch
    %22 = sbr.rel (0) target = $region25
  $region24: #{tpu_custom_call.1} parent=0 // pred_region
    _
  $region25: #{tpu_custom_call.1} parent=0 // pred_fallthru
    _
  %v23 = vld [vmem:[%s1] sm:$0xff]
  %v24 = vld [vmem:[%s1 + $0x8] sm:$0xff]
  %v25 = vld [vmem:[%s1 + $0x10] sm:$0xff]
  %v26 = vld [vmem:[%s1 + $0x18] sm:$0xff]
  %v27 = vld [vmem:[%s0] sm:$0xff]
  %v28 = vld [vmem:[%s0 + $0x8] sm:$0xff]
  %v29 = vld [vmem:[%s0 + $0x10] sm:$0xff]
  %v30 = vld [vmem:[%s0 + $0x18] sm:$0xff]
  %vm31 = vcmask 261120
  %v33 = vsel %vm31, %v23, 0
  %v36 = vsel %vm31, %v24, 0
  %v39 = vsel %vm31, %v25, 0
  %v42 = vsel %vm31, %v26, 0
  %44 = vmatpush.msra.mxu0 0.0
  %45 = vmatpush.msra.mxu0 0.0
  %46 = vmatpush.msra.mxu0 0.0
  %47 = vmatpush.msra.mxu0 0.0
  %48 = vmatpush.msra.mxu0 0.0
  %49 = vmatpush.msra.mxu0 0.0
  %50 = vmatpush.msra.mxu0 0.0
  %51 = vmatpush.msra.mxu0 0.0
  %52 = vmatpush.msra.mxu0 0.0
  %53 = vmatpush.msra.mxu0 0.0
  %54 = vmatpush.msra.mxu0 0.0
  %55 = vmatpush.msra.mxu0 0.0
  %56 = vmatpush.msra.mxu0 %v30
  %57 = vmatpush.msra.mxu0 %v29
  %58 = vmatpush.msra.mxu0 %v28
  %59 = vmatpush.msra.mxu0 %v27
  %60 = vmatmul.f32.gmra.mxu0 %v33
  %v61 = vpop.f32.mrf.mxu0
  %v62 = vadd.f32 0.0, %v61
  %63 = vmatmul.f32.gmra.mxu0 %v36
  %v64 = vpop.f32.mrf.mxu0
  %v65 = vadd.f32 0.0, %v64
  %66 = vmatmul.f32.gmra.mxu0 %v39
  %v67 = vpop.f32.mrf.mxu0
  %v68 = vadd.f32 0.0, %v67
  %69 = vmatmul.f32.gmra.mxu0 %v42
  %v70 = vpop.f32.mrf.mxu0
  %v71 = vadd.f32 0.0, %v70
  %72 = vdwg.mxu0
  %v73 = vld [vmem:[%s2] sm:$0xff]
  %v74 = vld [vmem:[%s2 + $0x8] sm:$0xff]
  %v75 = vld [vmem:[%s2 + $0x10] sm:$0xff]
  %v76 = vld [vmem:[%s2 + $0x18] sm:$0xff]
  %v77 = vld [vmem:[%s3] sm:$0xff]
  %v78 = vld [vmem:[%s3 + $0x8] sm:$0xff]
  %v79 = vld [vmem:[%s3 + $0x10] sm:$0xff]
  %v80 = vld [vmem:[%s3 + $0x18] sm:$0xff]
  %v82 = vsel %vm31, %v73, 0
  %v85 = vsel %vm31, %v74, 0
  %v88 = vsel %vm31, %v75, 0
  %v91 = vsel %vm31, %v76, 0
  %93 = vmatpush.msra.mxu0 0.0
  %94 = vmatpush.msra.mxu0 0.0
  %95 = vmatpush.msra.mxu0 0.0
  %96 = vmatpush.msra.mxu0 0.0
  %97 = vmatpush.msra.mxu0 0.0
  %98 = vmatpush.msra.mxu0 0.0
  %99 = vmatpush.msra.mxu0 0.0
  %100 = vmatpush.msra.mxu0 0.0
  %101 = vmatpush.msra.mxu0 0.0
  %102 = vmatpush.msra.mxu0 0.0
  %103 = vmatpush.msra.mxu0 0.0
  %104 = vmatpush.msra.mxu0 0.0
  %105 = vmatpush.msra.mxu0 %v71
  %106 = vmatpush.msra.mxu0 %v68
  %107 = vmatpush.msra.mxu0 %v65
  %108 = vmatpush.msra.mxu0 %v62
  %109 = vmatmul.f32.gmra.mxu0 %v82
  %v110 = vpop.f32.mrf.mxu0
  %v111 = vadd.f32 0.0, %v110
  %112 = vmatmul.f32.gmra.mxu0 %v85
  %v113 = vpop.f32.mrf.mxu0
  %v114 = vadd.f32 0.0, %v113
  %115 = vmatmul.f32.gmra.mxu0 %v88
  %v116 = vpop.f32.mrf.mxu0
  %v117 = vadd.f32 0.0, %v116
  %118 = vmatmul.f32.gmra.mxu0 %v91
  %v119 = vpop.f32.mrf.mxu0
  %v120 = vadd.f32 0.0, %v119
  %121 = vdwg.mxu0
  %v122 = vmul.f32 %v111, 0.0025
  %v123 = vmul.f32 %v114, 0.0025
  %v124 = vmul.f32 %v117, 0.0025
  %v125 = vmul.f32 %v120, 0.0025
  %127 = vset.pattern.permute.xlu0 0
  %128 = vperm.xlu0 %127, %v77
  %v129 = vpop.permute.xlu0 %128
  %132 = vset.pattern.permute.xlu0 0
  %133 = vperm.xlu0 %132, %v78
  %v134 = vpop.permute.xlu0 %133
  %137 = vset.pattern.permute.xlu0 0
  %138 = vperm.xlu0 %137, %v79
  %v139 = vpop.permute.xlu0 %138
  %142 = vset.pattern.permute.xlu0 0
  %143 = vperm.xlu0 %142, %v80
  %v144 = vpop.permute.xlu0 %143
  %v146 = vadd.f32 %v122, %v129
  %v147 = vadd.f32 %v123, %v134
  %v148 = vadd.f32 %v124, %v139
  %v149 = vadd.f32 %v125, %v144
  %v150 = vmax.f32 %v146, 0.0
  %v151 = vmax.f32 %v147, 0.0
  %v152 = vmax.f32 %v148, 0.0
  %v153 = vmax.f32 %v149, 0.0
  %v154 = vld [vmem:[%s4] sm:$0xff]
  %v155 = vld [vmem:[%s4 + $0x8] sm:$0xff]
  %v156 = vld [vmem:[%s4 + $0x10] sm:$0xff]
  %v157 = vld [vmem:[%s4 + $0x18] sm:$0xff]
  %v158 = vld [vmem:[%s5] sm:$0xff]
  %v159 = vld [vmem:[%s5 + $0x8] sm:$0xff]
  %v160 = vld [vmem:[%s5 + $0x10] sm:$0xff]
  %v161 = vld [vmem:[%s5 + $0x18] sm:$0xff]
  %v163 = vsel %vm31, %v154, 0
  %v166 = vsel %vm31, %v155, 0
  %v169 = vsel %vm31, %v156, 0
  %v172 = vsel %vm31, %v157, 0
  %174 = vmatpush.msra.mxu0 0.0
  %175 = vmatpush.msra.mxu0 0.0
  %176 = vmatpush.msra.mxu0 0.0
  %177 = vmatpush.msra.mxu0 0.0
  %178 = vmatpush.msra.mxu0 0.0
  %179 = vmatpush.msra.mxu0 0.0
  %180 = vmatpush.msra.mxu0 0.0
  %181 = vmatpush.msra.mxu0 0.0
  %182 = vmatpush.msra.mxu0 0.0
  %183 = vmatpush.msra.mxu0 0.0
  %184 = vmatpush.msra.mxu0 0.0
  %185 = vmatpush.msra.mxu0 0.0
  %186 = vmatpush.msra.mxu0 %v153
  %187 = vmatpush.msra.mxu0 %v152
  %188 = vmatpush.msra.mxu0 %v151
  %189 = vmatpush.msra.mxu0 %v150
  %190 = vmatmul.f32.gmra.mxu0 %v163
  %v191 = vpop.f32.mrf.mxu0
  %v192 = vadd.f32 0.0, %v191
  %193 = vmatmul.f32.gmra.mxu0 %v166
  %v194 = vpop.f32.mrf.mxu0
  %v195 = vadd.f32 0.0, %v194
  %196 = vmatmul.f32.gmra.mxu0 %v169
  %v197 = vpop.f32.mrf.mxu0
  %v198 = vadd.f32 0.0, %v197
  %199 = vmatmul.f32.gmra.mxu0 %v172
  %v200 = vpop.f32.mrf.mxu0
  %v201 = vadd.f32 0.0, %v200
  %202 = vdwg.mxu0
  %v203 = vmul.f32 %v192, 0.0025
  %v204 = vmul.f32 %v195, 0.0025
  %v205 = vmul.f32 %v198, 0.0025
  %v206 = vmul.f32 %v201, 0.0025
  %208 = vset.pattern.permute.xlu0 0
  %209 = vperm.xlu0 %208, %v158
  %v210 = vpop.permute.xlu0 %209
  %213 = vset.pattern.permute.xlu0 0
  %214 = vperm.xlu0 %213, %v159
  %v215 = vpop.permute.xlu0 %214
  %218 = vset.pattern.permute.xlu0 0
  %219 = vperm.xlu0 %218, %v160
  %v220 = vpop.permute.xlu0 %219
  %223 = vset.pattern.permute.xlu0 0
  %224 = vperm.xlu0 %223, %v161
  %v225 = vpop.permute.xlu0 %224
  %v227 = vadd.f32 %v203, %v210
  %v228 = vadd.f32 %v204, %v215
  %v229 = vadd.f32 %v205, %v220
  %v230 = vadd.f32 %v206, %v225
  %v231 = vmax.f32 %v227, 0.0
  %v232 = vmax.f32 %v228, 0.0
  %v233 = vmax.f32 %v229, 0.0
  %v234 = vmax.f32 %v230, 0.0
  %vm235 = vcmask 64512
  %236 = vst.msk [vmem:[%s6] sm:$0xff] %vm235, %v231
  %237 = vst.msk [vmem:[%s6 + $0x8] sm:$0xff] %vm235, %v232
  %238 = vst.msk [vmem:[%s6 + $0x10] sm:$0xff] %vm235, %v233
  %239 = vst.msk [vmem:[%s6 + $0x18] sm:$0xff] %vm235, %v234
  // Predicated region
  $region26: #{tpu_custom_call.1} parent=0 // pred_check
    _
  $region27: #{tpu_custom_call.1} parent=0 // pred_check_branch
    %241 = sbr.rel (0) target = $region29
  $region28: #{tpu_custom_call.1} parent=0 // pred_region
    _
  $region29: #{tpu_custom_call.1} parent=0 // pred_fallthru
    _
  // Predicated region
  $region30: #{tpu_custom_call.1} parent=0 // pred_check
    _
  $region31: #{tpu_custom_call.1} parent=0 // pred_check_branch
    %243 = sbr.rel (0) target = $region33
  $region32: #{tpu_custom_call.1} parent=0 // pred_region
    _
  $region33: #{tpu_custom_call.1} parent=0 // pred_fallthru
    _

</llo_original>
